<compile_context>
chip_gen: v6e
topology: v6e:2x2x1
jax: 0.10.0
libtpu: 0.0.40
codegen_flags: <defaults>
</compile_context>

<pallas_src>
import numpy as np
import jax
import jax.numpy as jnp
from jax import lax
from jax.experimental import pallas as pl
from jax.experimental.pallas import tpu as pltpu

# ----- few-shot episode hyper-parameters (small, deterministic) -----
N_EPISODES = 4
N_WAY = 5
K_SHOT = 2
N_SUPPORT = N_WAY * K_SHOT      # 10
N_QUERY = 8
NUM_FEATURES = 32               # backbone channel count (resnet18 would give 512)
FEAT_H = 4
FEAT_W = 4


def protonet_kernel(lab_ref, sup_ref, que_ref, out_ref):
    """Fused ProtoNet head for one episode (grid step).

    lab_ref : (1, 1, n_sup)        int32   support labels in [0, n_way)
    sup_ref : (1, n_sup, H*W, C)   float32 support backbone feature maps (channel-last)
    que_ref : (1, n_que, H*W, C)   float32 query   backbone feature maps (channel-last)
    out_ref : (1, n_que, n_way)    float32 logits
    """
    _, n_sup, hw, d = sup_ref.shape
    n_que = que_ref.shape[1]
    n_way = out_ref.shape[2]

    # ---- encode(): AdaptiveAvgPool2d((1,1)).squeeze() == mean over spatial positions.
    # Channel dim is already lane-dense; the spatial sum is a small sublane reduction.
    inv_hw = 1.0 / float(hw)
    sup_feat = jnp.sum(sup_ref[0], axis=1) * inv_hw                 # (n_sup, d)
    que_feat = jnp.sum(que_ref[0], axis=1) * inv_hw                 # (n_que, d)

    # ---- one_hot(support_labels, n_way).transpose(0,1): iota == label compare ----
    labels = lab_ref[0]                                             # (1, n_sup) int32
    cls_ids = lax.broadcasted_iota(jnp.int32, (n_way, n_sup), 0)    # row index = class id
    onehot_t = (cls_ids == labels).astype(jnp.float32)              # (n_way, n_sup)

    # ---- prototypes: one_hot^T @ sup_feat, divided by per-class counts ----
    proto = jnp.dot(onehot_t, sup_feat,
                    preferred_element_type=jnp.float32)             # (n_way, d)
    counts = jnp.sum(onehot_t, axis=-1, keepdims=True)              # (n_way, 1)
    counts = jnp.maximum(counts, 1.0)                               # guard: empty class
    proto = proto * pl.reciprocal(counts)                           # exact (not approx)

    # ---- compute_similarity(mode='euc'):  -(AA - 2*AB + BB) / d ----
    # Single MXU push covers both AB and BB: sublane-stack [que_feat ; ones] against
    # [proto ; proto*proto] with an NT dot_general (no explicit transposes anywhere).
    lhs_aug = jnp.concatenate(
        [que_feat, jnp.ones((1, d), jnp.float32)], axis=0)          # (n_que+1, d)
    rhs_aug = jnp.concatenate([proto, proto * proto], axis=0)       # (2*n_way, d)
    big = lax.dot_general(lhs_aug, rhs_aug, (((1,), (1,)), ((), ())),
                          preferred_element_type=jnp.float32)       # (n_que+1, 2*n_way)
    ab = big[:n_que, :n_way]                                        # (n_que, n_way)
    bb = big[n_que:n_que + 1, n_way:]                               # (1, n_way) ||p_j||^2
    aa = jnp.sum(que_feat * que_feat, axis=-1, keepdims=True)       # (n_que, 1)

    dist = aa - 2.0 * ab + bb
    out_ref[0] = (-dist * (1.0 / float(d))).astype(out_ref.dtype)


def protonet_forward(support_maps, support_labels, query_maps, n_way=N_WAY):
    """ProtoNet.forward (default 'euc' path) from backbone feature maps, episode-batched.

    support_maps   : (E, n_sup, H, W, C) float32  -- NHWC (TPU-native conv output layout)
    support_labels : (E, n_sup)          int      -- class ids in [0, n_way)
    query_maps     : (E, n_que, H, W, C) float32
    returns        : (E, n_que, n_way)   float32 logits
    """
    e, n_sup, h, w, c = support_maps.shape
    n_que = query_maps.shape[1]

    # Free reshapes only (no transposes): channel dim stays last / lane-dense.
    sup = support_maps.reshape(e, n_sup, h * w, c)
    que = query_maps.reshape(e, n_que, h * w, c)
    lab = support_labels.reshape(e, 1, n_sup).astype(jnp.int32)

    def ep_spec(shape):
        tail = (0,) * (len(shape) - 1)
        return pl.BlockSpec((1,) + tuple(shape[1:]), lambda ep: (ep,) + tail)

    flops_per_ep = (2 * (n_sup + n_que) * h * w * c            # global average pools
                    + 2 * n_way * n_sup * c + n_way * n_sup    # prototype matmul + counts
                    + 2 * (n_que + 1) * 2 * n_way * c          # fused AB/BB matmul
                    + 2 * n_que * c                            # AA column
                    + 4 * n_que * n_way)                       # dist assembly / scaling
    bytes_per_ep = 4 * ((n_sup + n_que) * h * w * c + n_sup + n_que * n_way)
    cost = pl.CostEstimate(flops=e * flops_per_ep, transcendentals=0,
                           bytes_accessed=e * bytes_per_ep)

    return pl.pallas_call(
        protonet_kernel,
        out_shape=jax.ShapeDtypeStruct((e, n_que, n_way), jnp.float32),
        grid=(e,),                                             # one step per episode
        in_specs=[ep_spec(lab.shape), ep_spec(sup.shape), ep_spec(que.shape)],
        out_specs=ep_spec((e, n_que, n_way)),
        compiler_params=pltpu.CompilerParams(dimension_semantics=("parallel",)),
        cost_estimate=cost,
    )(lab, sup, que)


def reference_forward(support_maps, support_labels, query_maps, n_way=N_WAY):
    """Plain-JAX mirror of PyTorch ProtoNet.forward (euclidean mode), NHWC inputs."""
    sup_feat = jnp.mean(support_maps, axis=(2, 3))                   # (E, n_sup, c)
    que_feat = jnp.mean(query_maps, axis=(2, 3))                     # (E, n_que, c)
    onehot_t = jnp.swapaxes(
        jax.nn.one_hot(support_labels, n_way, dtype=jnp.float32), 1, 2)  # (E, n_way, n_sup)
    proto = onehot_t @ sup_feat                                      # (E, n_way, c)
    proto = proto / jnp.sum(onehot_t, axis=-1, keepdims=True)
    ab = jnp.einsum('eqd,ewd->eqw', que_feat, proto)
    aa = jnp.sum(que_feat * que_feat, axis=-1, keepdims=True)
    bb = jnp.sum(proto * proto, axis=-1)[:, None, :]
    dist = aa - 2.0 * ab + bb
    return -dist / que_feat.shape[-1]


if __name__ == "__main__":
    root = jax.random.PRNGKey(0)
    ks, kq = jax.random.split(root, 2)
    # Backbone feature maps in NHWC (TPU-native) layout -- no wrapper transposes needed.
    support_maps = jax.random.normal(
        ks, (N_EPISODES, N_SUPPORT, FEAT_H, FEAT_W, NUM_FEATURES), jnp.float32)
    query_maps = jax.random.normal(
        kq, (N_EPISODES, N_QUERY, FEAT_H, FEAT_W, NUM_FEATURES), jnp.float32)
    support_labels = jnp.tile(jnp.arange(N_WAY, dtype=jnp.int32),
                              (N_EPISODES, K_SHOT))                  # (E, 10): [0..4, 0..4]

    logits = protonet_forward(support_maps, support_labels, query_maps)
    logits = jax.block_until_ready(logits)

    ref = reference_forward(support_maps, support_labels, query_maps)
    np.testing.assert_allclose(np.asarray(logits), np.asarray(ref), rtol=1e-4, atol=1e-4)

    print("KERNEL_OK")
</pallas_src>

<mosaic_0001>
module attributes {stable_mosaic.version = 11 : i64} {
  func.func @protonet_kernel(%arg0: i32, %arg1: memref<1x1x10xi32, #tpu.memory_space<vmem>>, %arg2: memref<1x10x16x32xf32, #tpu.memory_space<vmem>>, %arg3: memref<1x8x16x32xf32, #tpu.memory_space<vmem>>, %arg4: memref<1x8x5xf32, #tpu.memory_space<vmem>>) attributes {dimension_semantics = [#tpu.dimension_semantics<parallel>], iteration_bounds = array<i64: 4>, scalar_prefetch = 0 : i64, scratch_operands = 0 : i64, tpu.core_type = #tpu.core_type<tc>, window_params = [{transform_indices = @transform_0, window_bounds = array<i64: 1, 1, 10>}, {transform_indices = @transform_1, window_bounds = array<i64: 1, 10, 16, 32>}, {transform_indices = @transform_2, window_bounds = array<i64: 1, 8, 16, 32>}, {transform_indices = @transform_3, window_bounds = array<i64: 1, 8, 5>}]} {
    %c0 = arith.constant 0 : index
    %c0_0 = arith.constant 0 : index
    %c0_1 = arith.constant 0 : index
    %c0_2 = arith.constant 0 : index
    %0 = vector.load %arg2[%c0, %c0_0, %c0_1, %c0_2] : memref<1x10x16x32xf32, #tpu.memory_space<vmem>>, vector<1x10x16x32xf32>
    %1 = vector.shape_cast %0 : vector<1x10x16x32xf32> to vector<10x16x32xf32>
    %cst = arith.constant dense<0.000000e+00> : vector<10x32xf32>
    %2 = vector.multi_reduction <add>, %1, %cst [1] : vector<10x16x32xf32> to vector<10x32xf32>
    %cst_3 = arith.constant 6.250000e-02 : f32
    %3 = vector.broadcast %cst_3 : f32 to vector<10x32xf32>
    %4 = arith.mulf %2, %3 : vector<10x32xf32>
    %c0_4 = arith.constant 0 : index
    %c0_5 = arith.constant 0 : index
    %c0_6 = arith.constant 0 : index
    %c0_7 = arith.constant 0 : index
    %5 = vector.load %arg3[%c0_4, %c0_5, %c0_6, %c0_7] : memref<1x8x16x32xf32, #tpu.memory_space<vmem>>, vector<1x8x16x32xf32>
    %6 = vector.shape_cast %5 : vector<1x8x16x32xf32> to vector<8x16x32xf32>
    %cst_8 = arith.constant dense<0.000000e+00> : vector<8x32xf32>
    %7 = vector.multi_reduction <add>, %6, %cst_8 [1] : vector<8x16x32xf32> to vector<8x32xf32>
    %cst_9 = arith.constant 6.250000e-02 : f32
    %8 = vector.broadcast %cst_9 : f32 to vector<8x32xf32>
    %9 = arith.mulf %7, %8 : vector<8x32xf32>
    %c0_10 = arith.constant 0 : index
    %c0_11 = arith.constant 0 : index
    %c0_12 = arith.constant 0 : index
    %10 = vector.load %arg1[%c0_10, %c0_11, %c0_12] : memref<1x1x10xi32, #tpu.memory_space<vmem>>, vector<1x1x10xi32>
    %11 = vector.shape_cast %10 : vector<1x1x10xi32> to vector<1x10xi32>
    %12 = tpu.iota {dimensions = array<i32: 0>} : vector<5x10xi32>
    %13 = vector.broadcast %11 : vector<1x10xi32> to vector<5x10xi32>
    %14 = arith.cmpi eq, %12, %13 : vector<5x10xi32>
    %15 = arith.extui %14 : vector<5x10xi1> to vector<5x10xi32>
    %16 = arith.sitofp %15 : vector<5x10xi32> to vector<5x10xf32>
    %cst_13 = arith.constant dense<0.000000e+00> : vector<5x32xf32>
    %17 = tpu.matmul %16, %4, %cst_13 {dimension_numbers = #tpu.dot_dimension_numbers<[1], [0], [0], [1], [0, 0, 1, 1], [], []>} : vector<5x10xf32>, vector<10x32xf32>, vector<5x32xf32> -> vector<5x32xf32>
    %cst_14 = arith.constant dense<0.000000e+00> : vector<5xf32>
    %18 = vector.multi_reduction <add>, %16, %cst_14 [1] : vector<5x10xf32> to vector<5xf32>
    %19 = vector.shape_cast %18 : vector<5xf32> to vector<5x1xf32>
    %cst_15 = arith.constant 1.000000e+00 : f32
    %20 = vector.broadcast %cst_15 : f32 to vector<5x1xf32>
    %21 = arith.maximumf %19, %20 : vector<5x1xf32>
    %22 = tpu.reciprocal %21 : vector<5x1xf32> -> vector<5x1xf32>
    %23 = vector.broadcast %22 : vector<5x1xf32> to vector<5x32xf32>
    %24 = arith.mulf %17, %23 : vector<5x32xf32>
    %cst_16 = arith.constant 1.000000e+00 : f32
    %25 = vector.broadcast %cst_16 : f32 to vector<1x32xf32>
    %26 = tpu.concatenate %9, %25 in 0 : vector<8x32xf32>, vector<1x32xf32> -> vector<9x32xf32>
    %27 = arith.mulf %24, %24 : vector<5x32xf32>
    %28 = tpu.concatenate %24, %27 in 0 : vector<5x32xf32>, vector<5x32xf32> -> vector<10x32xf32>
    %cst_17 = arith.constant dense<0.000000e+00> : vector<9x10xf32>
    %29 = tpu.matmul %26, %28, %cst_17 {dimension_numbers = #tpu.dot_dimension_numbers<[1], [1], [0], [0], [0, 0, 1, 0], [], []>} : vector<9x32xf32>, vector<10x32xf32>, vector<9x10xf32> -> vector<9x10xf32>
    %30 = vector.extract_strided_slice %29 {offsets = [0, 0], sizes = [8, 5], strides = [1, 1]} : vector<9x10xf32> to vector<8x5xf32>
    %31 = vector.extract_strided_slice %29 {offsets = [8, 5], sizes = [1, 5], strides = [1, 1]} : vector<9x10xf32> to vector<1x5xf32>
    %32 = arith.mulf %9, %9 : vector<8x32xf32>
    %cst_18 = arith.constant dense<0.000000e+00> : vector<8xf32>
    %33 = vector.multi_reduction <add>, %32, %cst_18 [1] : vector<8x32xf32> to vector<8xf32>
    %34 = vector.shape_cast %33 : vector<8xf32> to vector<8x1xf32>
    %cst_19 = arith.constant 2.000000e+00 : f32
    %35 = vector.broadcast %cst_19 : f32 to vector<8x5xf32>
    %36 = arith.mulf %35, %30 : vector<8x5xf32>
    %37 = vector.broadcast %34 : vector<8x1xf32> to vector<8x5xf32>
    %38 = arith.subf %37, %36 : vector<8x5xf32>
    %39 = vector.broadcast %31 : vector<1x5xf32> to vector<8x5xf32>
    %40 = arith.addf %38, %39 : vector<8x5xf32>
    %cst_20 = arith.constant 0.000000e+00 : f32
    %41 = vector.broadcast %cst_20 : f32 to vector<8x5xf32>
    %42 = arith.subf %41, %40 : vector<8x5xf32>
    %cst_21 = arith.constant 3.125000e-02 : f32
    %43 = vector.broadcast %cst_21 : f32 to vector<8x5xf32>
    %44 = arith.mulf %42, %43 : vector<8x5xf32>
    %c0_22 = arith.constant 0 : index
    %c0_23 = arith.constant 0 : index
    %c0_24 = arith.constant 0 : index
    %45 = vector.load %arg4[%c0_22, %c0_23, %c0_24] : memref<1x8x5xf32, #tpu.memory_space<vmem>>, vector<1x8x5xf32>
    %46 = vector.shape_cast %45 : vector<1x8x5xf32> to vector<8x5xf32>
    %47 = vector.shape_cast %44 : vector<8x5xf32> to vector<1x8x5xf32>
    tpu.vector_store %arg4[%c0_22, %c0_23, %c0_24], %47 {strides = array<i32>} : memref<1x8x5xf32, #tpu.memory_space<vmem>>, vector<1x8x5xf32>,
    return
  }
  func.func @transform_0(%arg0: i32) -> (i32, i32, i32) {
    %c0_i32 = arith.constant 0 : i32
    %c0_i32_0 = arith.constant 0 : i32
    %c0_i32_1 = arith.constant 0 : i32
    return %arg0, %c0_i32, %c0_i32_0 : i32, i32, i32
  }
  func.func @transform_1(%arg0: i32) -> (i32, i32, i32, i32) {
    %c0_i32 = arith.constant 0 : i32
    %c0_i32_0 = arith.constant 0 : i32
    %c0_i32_1 = arith.constant 0 : i32
    %c0_i32_2 = arith.constant 0 : i32
    return %arg0, %c0_i32, %c0_i32_0, %c0_i32_1 : i32, i32, i32, i32
  }
  func.func @transform_2(%arg0: i32) -> (i32, i32, i32, i32) {
    %c0_i32 = arith.constant 0 : i32
    %c0_i32_0 = arith.constant 0 : i32
    %c0_i32_1 = arith.constant 0 : i32
    %c0_i32_2 = arith.constant 0 : i32
    return %arg0, %c0_i32, %c0_i32_0, %c0_i32_1 : i32, i32, i32, i32
  }
  func.func @transform_3(%arg0: i32) -> (i32, i32, i32) {
    %c0_i32 = arith.constant 0 : i32
    %c0_i32_0 = arith.constant 0 : i32
    %c0_i32_1 = arith.constant 0 : i32
    return %arg0, %c0_i32, %c0_i32_0 : i32, i32, i32
  }
}

</mosaic_0001>

<llo_original>
// kernel: tpu_custom_call.1
$region0: #{tpu_custom_call.1}
  #allocation0 [shape = 'u32[]', space=smem, size = 0x4, offset = 0x4, fixed_abs, tag = 'smem constant byte address 0x4 - core index']
  #allocation1 [shape = 'u32[144,128]{1,0:T(1,128)}', space=vmem, size = 0x12000, scoped, tag = 'internal scratch']
  %s0 = inlined_call_operand.hbm [shape: s32[4,1,10], index: 0, kind: input, shape index: {}]
  %s1 = inlined_call_operand.hbm [shape: f32[4,10,16,32], index: 1, kind: input, shape index: {}]
  %s2 = inlined_call_operand.hbm [shape: f32[4,8,16,32], index: 2, kind: input, shape index: {}]
  %s3 = inlined_call_operand.vmem [shape: f32[4,8,5], index: 3, kind: output, shape index: {}]
  %s4 = sld [smem:[#allocation0]]
  $region57: #{tpu_custom_call.1} parent=0
    _
  %s6 = ssub.s32 1, %s4
  %s7 = scalar_select 0, %s6, %s4
  $region1: #{tpu_custom_call.1} parent=0
    #allocation2 [shape = 'u8[1024]{0}', space=vmem, size = 0x400, scoped, tag = 'input window, operand 0']
    #allocation3 [shape = 's32[2]{0}', space=sflag, size = 0x8, scoped, tag = 'scoped memory for tpu_custom_call.1']
    #allocation4 [shape = 'u8[163840]{0}', space=vmem, size = 0x28000, scoped, tag = 'input window, operand 1']
    #allocation5 [shape = 's32[2]{0}', space=sflag, size = 0x8, scoped, tag = 'scoped memory for tpu_custom_call.1']
    #allocation6 [shape = 'u8[131072]{0}', space=vmem, size = 0x20000, scoped, tag = 'input window, operand 2']
    %8 = vsyncpa [#allocation3], 0
    %s9 = scalar_lea.sflag [#allocation3], 1
    %10 = vsyncpa %s9, 0
    %11 = vsyncpa [#allocation5], 0
    %s12 = scalar_lea.sflag [#allocation5], 1
    %13 = vsyncpa %s12, 0
    loop: start=0, step=1, limit=6
    $region2: #{tpu_custom_call.1} parent=1 // loop_pre_header
      _
    $region3: #{tpu_custom_call.1} parent=1 // loop_header
      %s15 = sphi 0, %s19
      %p16 = scmp.ge.s32.totalorder %s15, 6
      %s25 = sphi 0, %s27
      %s28 = sphi 0, %s25
      %s29 = sphi 0, %s28
      %s45 = sphi 0, %s29
      %s51 = sphi 0, %s53
      %s54 = sphi 0, %s51
      %s55 = sphi 0, %s54
      %s71 = sphi 0, %s55
      %s77 = sphi 0, %s79
      %s80 = sphi 0, %s77
      %s81 = sphi 0, %s80
      %s97 = sphi 0, %s81
      %s103 = sphi 0, %s105
      %s106 = sphi 0, %s103
      %s107 = sphi 0, %s106
      %s123 = sphi 0, %s107
    $region4: #{tpu_custom_call.1} parent=1 // loop_header_branch
      %18 = sbr.rel (%p16) target = $region8
    $region5: #{tpu_custom_call.1} parent=1 // loop_body
      %s20 = ssub.s32 %s15, 1
      %s21 = ssub.s32 %s15, 2
      %s22 = sadd.s32 %s15, 1
      %s23 = ssub.s32 %s15, %s22
      %p24 = scmp.eq.s32.totalorder %s23, 0
      %s26 = sadd.s32 %s25, 1
      %s27 = scalar_select %p24, %s25, %s26
      %p30 = pneg %p24
      %p31 = scmp.eq.s32.totalorder %s15, 3
      %p32 = por %p30, %p31
      %p33 = scmp.ne.s32.totalorder %s25, %s28
      %p34 = scmp.eq.s32.totalorder %s15, 0
      %p35 = por %p33, %p34
      %p36 = scmp.ne.s32.totalorder %s25, %s28
      %p37 = scmp.eq.s32.totalorder %s20, 3
      %p38 = por %p36, %p37
      %p39 = scmp.ne.s32.totalorder %s28, %s29
      %p40 = scmp.eq.s32.totalorder %s20, 0
      %p41 = por %p39, %p40
      %p42 = scmp.ne.s32.totalorder %s28, %s29
      %p43 = scmp.eq.s32.totalorder %s21, 3
      %p44 = por %p42, %p43
      %p46 = scmp.ne.s32.totalorder %s29, %s45
      %p47 = scmp.eq.s32.totalorder %s21, 0
      %p48 = por %p46, %p47
      %s49 = ssub.s32 %s15, %s22
      %p50 = scmp.eq.s32.totalorder %s49, 0
      %s52 = sadd.s32 %s51, 1
      %s53 = scalar_select %p50, %s51, %s52
      %p56 = pneg %p50
      %p57 = scmp.eq.s32.totalorder %s15, 3
      %p58 = por %p56, %p57
      %p59 = scmp.ne.s32.totalorder %s51, %s54
      %p60 = scmp.eq.s32.totalorder %s15, 0
      %p61 = por %p59, %p60
      %p62 = scmp.ne.s32.totalorder %s51, %s54
      %p63 = scmp.eq.s32.totalorder %s20, 3
      %p64 = por %p62, %p63
      %p65 = scmp.ne.s32.totalorder %s54, %s55
      %p66 = scmp.eq.s32.totalorder %s20, 0
      %p67 = por %p65, %p66
      %p68 = scmp.ne.s32.totalorder %s54, %s55
      %p69 = scmp.eq.s32.totalorder %s21, 3
      %p70 = por %p68, %p69
      %p72 = scmp.ne.s32.totalorder %s55, %s71
      %p73 = scmp.eq.s32.totalorder %s21, 0
      %p74 = por %p72, %p73
      %s75 = ssub.s32 %s15, %s22
      %p76 = scmp.eq.s32.totalorder %s75, 0
      %s78 = sadd.s32 %s77, 1
      %s79 = scalar_select %p76, %s77, %s78
      %p82 = pneg %p76
      %p83 = scmp.eq.s32.totalorder %s15, 3
      %p84 = por %p82, %p83
      %p85 = scmp.ne.s32.totalorder %s77, %s80
      %p86 = scmp.eq.s32.totalorder %s15, 0
      %p87 = por %p85, %p86
      %p88 = scmp.ne.s32.totalorder %s77, %s80
      %p89 = scmp.eq.s32.totalorder %s20, 3
      %p90 = por %p88, %p89
      %p91 = scmp.ne.s32.totalorder %s80, %s81
      %p92 = scmp.eq.s32.totalorder %s20, 0
      %p93 = por %p91, %p92
      %p94 = scmp.ne.s32.totalorder %s80, %s81
      %p95 = scmp.eq.s32.totalorder %s21, 3
      %p96 = por %p94, %p95
      %p98 = scmp.ne.s32.totalorder %s81, %s97
      %p99 = scmp.eq.s32.totalorder %s21, 0
      %p100 = por %p98, %p99
      %s101 = ssub.s32 %s15, %s22
      %p102 = scmp.eq.s32.totalorder %s101, 0
      %s104 = sadd.s32 %s103, 1
      %s105 = scalar_select %p102, %s103, %s104
      %p108 = pneg %p102
      %p109 = scmp.eq.s32.totalorder %s15, 3
      %p110 = por %p108, %p109
      %p111 = scmp.ne.s32.totalorder %s103, %s106
      %p112 = scmp.eq.s32.totalorder %s15, 0
      %p113 = por %p111, %p112
      %p114 = scmp.ne.s32.totalorder %s103, %s106
      %p115 = scmp.eq.s32.totalorder %s20, 3
      %p116 = por %p114, %p115
      %p117 = scmp.ne.s32.totalorder %s106, %s107
      %p118 = scmp.eq.s32.totalorder %s20, 0
      %p119 = por %p117, %p118
      %p120 = scmp.ne.s32.totalorder %s106, %s107
      %p121 = scmp.eq.s32.totalorder %s21, 3
      %p122 = por %p120, %p121
      %p124 = scmp.ne.s32.totalorder %s107, %s123
      %p125 = scmp.eq.s32.totalorder %s21, 0
      %p126 = por %p124, %p125
      %p127 = scmp.le.s32.totalorder 1, %s15
      %p128 = scmp.lt.s32.totalorder %s15, 5
      %p129 = pnand %p127, %p128
      %p130 = pneg %p129
      // Predicated region
      $region9: #{tpu_custom_call.1} parent=5 // pred_check
        _
      $region10: #{tpu_custom_call.1} parent=5 // pred_check_branch
        %132 = sbr.rel (%p129) target = $region12
      $region11: #{tpu_custom_call.1} parent=5 // pred_region
        %s133 = ssub.s32 %s15, 1
      $region12: #{tpu_custom_call.1} parent=5 // pred_fallthru
        _
      %p134 = scmp.lt.s32.totalorder %s15, 4
      // Predicated region
      $region13: #{tpu_custom_call.1} parent=5 // pred_check
        %p135 = pneg %p134
      $region14: #{tpu_custom_call.1} parent=5 // pred_check_branch
        %137 = sbr.rel (%p135) target = $region16
      $region15: #{tpu_custom_call.1} parent=5 // pred_region
        // Predicated region
        $region17: #{tpu_custom_call.1} parent=15 // pred_check
          %p138 = pneg %p35
        $region18: #{tpu_custom_call.1} parent=15 // pred_check_branch
          %140 = sbr.rel (%p138) target = $region20
        $region19: #{tpu_custom_call.1} parent=15 // pred_region
          %s141 = sand.u32 %s25, 1
          %s142 = scalar_lea.sflag [#allocation3], %s141
          %s143 = sand.u32 %s25, 1
          %s144 = scalar_lea.vmem [#allocation2], %s143
          %s146 = ssub.s32 16, 16
          %147 = vsyncadd %s142, %s146
          %s148 = smul.addr %s15, 16
          %s149 = scalar_lea.hbm %s0, %s148
          %s151 = sshll.u32 %s144, 4
          %s152 = int_to_ptr.vmem [resolvable:$true] %s151
          %154 = dma.hbm_to_vmem [thread:$0]  %s149, 16, %s152, %s142
        $region20: #{tpu_custom_call.1} parent=15 // pred_fallthru
          _
        // Predicated region
        $region21: #{tpu_custom_call.1} parent=15 // pred_check
          %p155 = pneg %p61
        $region22: #{tpu_custom_call.1} parent=15 // pred_check_branch
          %157 = sbr.rel (%p155) target = $region24
        $region23: #{tpu_custom_call.1} parent=15 // pred_region
          %s158 = sand.u32 %s15, 1
          %s159 = scalar_lea.sflag [#allocation5], %s158
          %s160 = sand.u32 %s51, 1
          %s161 = smul.addr %s160, 160
          %s162 = scalar_lea.vmem [#allocation4], %s161
          %s164 = ssub.s32 2560, 2560
          %165 = vsyncadd %s159, %s164
          %s166 = smul.addr %s15, 20
          %s167 = smul.addr %s166, 128
          %s168 = scalar_lea.hbm %s1, %s167
          %s169 = sshll.u32 %s162, 4
          %s170 = int_to_ptr.vmem [resolvable:$true] %s169
          %175 = dma.hbm_to_vmem [thread:$0]  %s168, 2560, %s170, %s159, 128, 128, 8
        $region24: #{tpu_custom_call.1} parent=15 // pred_fallthru
          _
        // Predicated region
        $region25: #{tpu_custom_call.1} parent=15 // pred_check
          %p176 = pneg %p87
        $region26: #{tpu_custom_call.1} parent=15 // pred_check_branch
          %178 = sbr.rel (%p176) target = $region28
        $region27: #{tpu_custom_call.1} parent=15 // pred_region
          %s179 = sand.u32 %s15, 1
          %s180 = scalar_lea.sflag [#allocation5], %s179
          %s181 = sand.u32 %s77, 1
          %s182 = smul.addr %s181, 128
          %s183 = scalar_lea.vmem [#allocation6], %s182
          %s185 = ssub.s32 2048, 2048
          %186 = vsyncadd %s180, %s185
          %s187 = smul.addr %s15, 16
          %s188 = smul.addr %s187, 128
          %s189 = scalar_lea.hbm %s2, %s188
          %s190 = sshll.u32 %s183, 4
          %s191 = int_to_ptr.vmem [resolvable:$true] %s190
          %196 = dma.hbm_to_vmem [thread:$0]  %s189, 2048, %s191, %s180, 128, 128, 8
        $region28: #{tpu_custom_call.1} parent=15 // pred_fallthru
          _
      $region16: #{tpu_custom_call.1} parent=5 // pred_fallthru
        _
      %p197 = scmp.le.s32.totalorder 1, %s15
      %p198 = scmp.lt.s32.totalorder %s15, 5
      %p199 = pnand %p197, %p198
      %p200 = pneg %p199
      // Predicated region
      $region29: #{tpu_custom_call.1} parent=5 // pred_check
        _
      $region30: #{tpu_custom_call.1} parent=5 // pred_check_branch
        %202 = sbr.rel (%p199) target = $region32
      $region31: #{tpu_custom_call.1} parent=5 // pred_region
        %s203 = ssub.s32 %s15, 1
        %s204 = sand.u32 %s28, 1
        %s205 = scalar_lea.sflag [#allocation3], %s204
        %s206 = sand.u32 %s28, 1
        %s207 = scalar_lea.vmem [#allocation2], %s206
        // Predicated region
        $region33: #{tpu_custom_call.1} parent=31 // pred_check
          %p208 = pneg %p41
        $region34: #{tpu_custom_call.1} parent=31 // pred_check_branch
          %210 = sbr.rel (%p208) target = $region36
        $region35: #{tpu_custom_call.1} parent=31 // pred_region
          %211 = dma.done %s205, 16
        $region36: #{tpu_custom_call.1} parent=31 // pred_fallthru
          _
        %s212 = sand.u32 %s20, 1
        %s213 = scalar_lea.sflag [#allocation5], %s212
        %s214 = sand.u32 %s54, 1
        %s215 = smul.addr %s214, 160
        %s216 = scalar_lea.vmem [#allocation4], %s215
        // Predicated region
        $region37: #{tpu_custom_call.1} parent=31 // pred_check
          %p217 = pneg %p67
        $region38: #{tpu_custom_call.1} parent=31 // pred_check_branch
          %219 = sbr.rel (%p217) target = $region40
        $region39: #{tpu_custom_call.1} parent=31 // pred_region
          %220 = dma.done %s213, 2560
        $region40: #{tpu_custom_call.1} parent=31 // pred_fallthru
          _
        %s221 = sand.u32 %s20, 1
        %s222 = scalar_lea.sflag [#allocation5], %s221
        %s223 = sand.u32 %s80, 1
        %s224 = smul.addr %s223, 128
        %s225 = scalar_lea.vmem [#allocation6], %s224
        // Predicated region
        $region41: #{tpu_custom_call.1} parent=31 // pred_check
          %p226 = pneg %p93
        $region42: #{tpu_custom_call.1} parent=31 // pred_check_branch
          %228 = sbr.rel (%p226) target = $region44
        $region43: #{tpu_custom_call.1} parent=31 // pred_region
          %229 = dma.done %s222, 2048
        $region44: #{tpu_custom_call.1} parent=31 // pred_fallthru
          _
        %s230 = sand.u32 %s28, 1
        %s231 = scalar_lea.sflag [#allocation3], %s230
        %s232 = sand.u32 %s28, 1
        %s233 = scalar_lea.vmem [#allocation2], %s232
        %p234 = pneg %p41
        %p235 = pneg %p38
        %s236 = sand.u32 %s20, 1
        %s237 = scalar_lea.sflag [#allocation5], %s236
        %s238 = sand.u32 %s54, 1
        %s239 = smul.addr %s238, 160
        %s240 = scalar_lea.vmem [#allocation4], %s239
        %p241 = pneg %p67
        %p242 = pneg %p64
        %s243 = sand.u32 %s20, 1
        %s244 = scalar_lea.sflag [#allocation5], %s243
        %s245 = sand.u32 %s80, 1
        %s246 = smul.addr %s245, 128
        %s247 = scalar_lea.vmem [#allocation6], %s246
        %p248 = pneg %p93
        %p249 = pneg %p90
        %p250 = pneg %p119
        %p251 = pneg %p116
        %p252 = scmp.lt.s32.totalorder %s20, 3
        %s253 = scalar_select %p252, %s20, 3
        %s254 = smul.addr %s253, 8
        %s255 = scalar_lea.vmem %s3, %s254
        %p256 = scmp.lt.s32.totalorder %s20, 3
        %s257 = scalar_select %p256, %s20, 3
        %s258 = smul.addr %s257, 8
        %s259 = scalar_lea.vmem %s3, %s258
        %v260 = vld [vmem:[%s216] sm:$0xff]
        %v261 = vld [vmem:[%s216 + $0x8] sm:$0xff]
        %v262 = vld [vmem:[%s216 + $0x10] sm:$0xff]
        %v263 = vld [vmem:[%s216 + $0x18] sm:$0xff]
        %v264 = vld [vmem:[%s216 + $0x20] sm:$0xff]
        %v265 = vld [vmem:[%s216 + $0x28] sm:$0xff]
        %v266 = vld [vmem:[%s216 + $0x30] sm:$0xff]
        %v267 = vld [vmem:[%s216 + $0x38] sm:$0xff]
        %v268 = vld [vmem:[%s216 + $0x40] sm:$0xff]
        %v269 = vld [vmem:[%s216 + $0x48] sm:$0xff]
        %v270 = vld [vmem:[%s216 + $0x50] sm:$0xff]
        %v271 = vld [vmem:[%s216 + $0x58] sm:$0xff]
        %v272 = vld [vmem:[%s216 + $0x60] sm:$0xff]
        %v273 = vld [vmem:[%s216 + $0x68] sm:$0xff]
        %v274 = vld [vmem:[%s216 + $0x70] sm:$0xff]
        %v275 = vld [vmem:[%s216 + $0x78] sm:$0xff]
        %v276 = vld [vmem:[%s216 + $0x80] sm:$0xff]
        %v277 = vld [vmem:[%s216 + $0x88] sm:$0xff]
        %v278 = vld [vmem:[%s216 + $0x90] sm:$0xff]
        %v279 = vld [vmem:[%s216 + $0x98] sm:$0xff]
        %vm280 = vcmask 261120
        %v281 = vsel %vm280, %v260, 0.0
        %v282 = vsel %vm280, %v261, 0.0
        %v283 = vadd.f32 %v281, %v282
        %v284 = vrot.slane %v283, 4
        %v285 = vadd.f32 %v283, %v284
        %v286 = vrot.slane %v285, 2
        %v287 = vadd.f32 %v285, %v286
        %v288 = vrot.slane %v287, 1
        %v289 = vadd.f32 %v287, %v288
        %v290 = vsel %vm280, %v262, 0.0
        %v291 = vsel %vm280, %v263, 0.0
        %v292 = vadd.f32 %v290, %v291
        %v293 = vrot.slane %v292, 4
        %v294 = vadd.f32 %v292, %v293
        %v295 = vrot.slane %v294, 2
        %v296 = vadd.f32 %v294, %v295
        %v297 = vrot.slane %v296, 1
        %v298 = vadd.f32 %v296, %v297
        %v299 = vsel %vm280, %v264, 0.0
        %v300 = vsel %vm280, %v265, 0.0
        %v301 = vadd.f32 %v299, %v300
        %v302 = vrot.slane %v301, 4
        %v303 = vadd.f32 %v301, %v302
        %v304 = vrot.slane %v303, 2
        %v305 = vadd.f32 %v303, %v304
        %v306 = vrot.slane %v305, 1
        %v307 = vadd.f32 %v305, %v306
        %v308 = vsel %vm280, %v266, 0.0
        %v309 = vsel %vm280, %v267, 0.0
        %v310 = vadd.f32 %v308, %v309
        %v311 = vrot.slane %v310, 4
        %v312 = vadd.f32 %v310, %v311
        %v313 = vrot.slane %v312, 2
        %v314 = vadd.f32 %v312, %v313
        %v315 = vrot.slane %v314, 1
        %v316 = vadd.f32 %v314, %v315
        %v317 = vsel %vm280, %v268, 0.0
        %v318 = vsel %vm280, %v269, 0.0
        %v319 = vadd.f32 %v317, %v318
        %v320 = vrot.slane %v319, 4
        %v321 = vadd.f32 %v319, %v320
        %v322 = vrot.slane %v321, 2
        %v323 = vadd.f32 %v321, %v322
        %v324 = vrot.slane %v323, 1
        %v325 = vadd.f32 %v323, %v324
        %v326 = vsel %vm280, %v270, 0.0
        %v327 = vsel %vm280, %v271, 0.0
        %v328 = vadd.f32 %v326, %v327
        %v329 = vrot.slane %v328, 4
        %v330 = vadd.f32 %v328, %v329
        %v331 = vrot.slane %v330, 2
        %v332 = vadd.f32 %v330, %v331
        %v333 = vrot.slane %v332, 1
        %v334 = vadd.f32 %v332, %v333
        %v335 = vsel %vm280, %v272, 0.0
        %v336 = vsel %vm280, %v273, 0.0
        %v337 = vadd.f32 %v335, %v336
        %v338 = vrot.slane %v337, 4
        %v339 = vadd.f32 %v337, %v338
        %v340 = vrot.slane %v339, 2
        %v341 = vadd.f32 %v339, %v340
        %v342 = vrot.slane %v341, 1
        %v343 = vadd.f32 %v341, %v342
        %v344 = vsel %vm280, %v274, 0.0
        %v345 = vsel %vm280, %v275, 0.0
        %v346 = vadd.f32 %v344, %v345
        %v347 = vrot.slane %v346, 4
        %v348 = vadd.f32 %v346, %v347
        %v349 = vrot.slane %v348, 2
        %v350 = vadd.f32 %v348, %v349
        %v351 = vrot.slane %v350, 1
        %v352 = vadd.f32 %v350, %v351
        %v353 = vsel %vm280, %v276, 0.0
        %v354 = vsel %vm280, %v277, 0.0
        %v355 = vadd.f32 %v353, %v354
        %v356 = vrot.slane %v355, 4
        %v357 = vadd.f32 %v355, %v356
        %v358 = vrot.slane %v357, 2
        %v359 = vadd.f32 %v357, %v358
        %v360 = vrot.slane %v359, 1
        %v361 = vadd.f32 %v359, %v360
        %v362 = vsel %vm280, %v278, 0.0
        %v363 = vsel %vm280, %v279, 0.0
        %v364 = vadd.f32 %v362, %v363
        %v365 = vrot.slane %v364, 4
        %v366 = vadd.f32 %v364, %v365
        %v367 = vrot.slane %v366, 2
        %v368 = vadd.f32 %v366, %v367
        %v369 = vrot.slane %v368, 1
        %v370 = vadd.f32 %v368, %v369
        %v371 = vmul.f32 %v289, 0.0625
        %v372 = vmul.f32 %v298, 0.0625
        %v373 = vmul.f32 %v307, 0.0625
        %v374 = vmul.f32 %v316, 0.0625
        %v375 = vmul.f32 %v325, 0.0625
        %v376 = vmul.f32 %v334, 0.0625
        %v377 = vmul.f32 %v343, 0.0625
        %v378 = vmul.f32 %v352, 0.0625
        %v379 = vmul.f32 %v361, 0.0625
        %v380 = vmul.f32 %v370, 0.0625
        %v381 = vld [vmem:[%s225] sm:$0xff]
        %v382 = vld [vmem:[%s225 + $0x8] sm:$0xff]
        %v383 = vld [vmem:[%s225 + $0x10] sm:$0xff]
        %v384 = vld [vmem:[%s225 + $0x18] sm:$0xff]
        %v385 = vld [vmem:[%s225 + $0x20] sm:$0xff]
        %v386 = vld [vmem:[%s225 + $0x28] sm:$0xff]
        %v387 = vld [vmem:[%s225 + $0x30] sm:$0xff]
        %v388 = vld [vmem:[%s225 + $0x38] sm:$0xff]
        %v389 = vld [vmem:[%s225 + $0x40] sm:$0xff]
        %v390 = vld [vmem:[%s225 + $0x48] sm:$0xff]
        %v391 = vld [vmem:[%s225 + $0x50] sm:$0xff]
        %v392 = vld [vmem:[%s225 + $0x58] sm:$0xff]
        %v393 = vld [vmem:[%s225 + $0x60] sm:$0xff]
        %v394 = vld [vmem:[%s225 + $0x68] sm:$0xff]
        %v395 = vld [vmem:[%s225 + $0x70] sm:$0xff]
        %v396 = vld [vmem:[%s225 + $0x78] sm:$0xff]
        %v397 = vsel %vm280, %v381, 0.0
        %v398 = vsel %vm280, %v382, 0.0
        %v399 = vadd.f32 %v397, %v398
        %v400 = vrot.slane %v399, 4
        %v401 = vadd.f32 %v399, %v400
        %v402 = vrot.slane %v401, 2
        %v403 = vadd.f32 %v401, %v402
        %v404 = vrot.slane %v403, 1
        %v405 = vadd.f32 %v403, %v404
        %v406 = vsel %vm280, %v383, 0.0
        %v407 = vsel %vm280, %v384, 0.0
        %v408 = vadd.f32 %v406, %v407
        %v409 = vrot.slane %v408, 4
        %v410 = vadd.f32 %v408, %v409
        %v411 = vrot.slane %v410, 2
        %v412 = vadd.f32 %v410, %v411
        %v413 = vrot.slane %v412, 1
        %v414 = vadd.f32 %v412, %v413
        %v415 = vsel %vm280, %v385, 0.0
        %v416 = vsel %vm280, %v386, 0.0
        %v417 = vadd.f32 %v415, %v416
        %v418 = vrot.slane %v417, 4
        %v419 = vadd.f32 %v417, %v418
        %v420 = vrot.slane %v419, 2
        %v421 = vadd.f32 %v419, %v420
        %v422 = vrot.slane %v421, 1
        %v423 = vadd.f32 %v421, %v422
        %v424 = vsel %vm280, %v387, 0.0
        %v425 = vsel %vm280, %v388, 0.0
        %v426 = vadd.f32 %v424, %v425
        %v427 = vrot.slane %v426, 4
        %v428 = vadd.f32 %v426, %v427
        %v429 = vrot.slane %v428, 2
        %v430 = vadd.f32 %v428, %v429
        %v431 = vrot.slane %v430, 1
        %v432 = vadd.f32 %v430, %v431
        %v433 = vsel %vm280, %v389, 0.0
        %v434 = vsel %vm280, %v390, 0.0
        %v435 = vadd.f32 %v433, %v434
        %v436 = vrot.slane %v435, 4
        %v437 = vadd.f32 %v435, %v436
        %v438 = vrot.slane %v437, 2
        %v439 = vadd.f32 %v437, %v438
        %v440 = vrot.slane %v439, 1
        %v441 = vadd.f32 %v439, %v440
        %v442 = vsel %vm280, %v391, 0.0
        %v443 = vsel %vm280, %v392, 0.0
        %v444 = vadd.f32 %v442, %v443
        %v445 = vrot.slane %v444, 4
        %v446 = vadd.f32 %v444, %v445
        %v447 = vrot.slane %v446, 2
        %v448 = vadd.f32 %v446, %v447
        %v449 = vrot.slane %v448, 1
        %v450 = vadd.f32 %v448, %v449
        %v451 = vsel %vm280, %v393, 0.0
        %v452 = vsel %vm280, %v394, 0.0
        %v453 = vadd.f32 %v451, %v452
        %v454 = vrot.slane %v453, 4
        %v455 = vadd.f32 %v453, %v454
        %v456 = vrot.slane %v455, 2
        %v457 = vadd.f32 %v455, %v456
        %v458 = vrot.slane %v457, 1
        %v459 = vadd.f32 %v457, %v458
        %v460 = vsel %vm280, %v395, 0.0
        %v461 = vsel %vm280, %v396, 0.0
        %v462 = vadd.f32 %v460, %v461
        %v463 = vrot.slane %v462, 4
        %v464 = vadd.f32 %v462, %v463
        %v465 = vrot.slane %v464, 2
        %v466 = vadd.f32 %v464, %v465
        %v467 = vrot.slane %v466, 1
        %v468 = vadd.f32 %v466, %v467
        %v469 = vmul.f32 %v405, 0.0625
        %v470 = vmul.f32 %v414, 0.0625
        %v471 = vmul.f32 %v423, 0.0625
        %v472 = vmul.f32 %v432, 0.0625
        %v473 = vmul.f32 %v441, 0.0625
        %v474 = vmul.f32 %v450, 0.0625
        %v475 = vmul.f32 %v459, 0.0625
        %v476 = vmul.f32 %v468, 0.0625
        %v477 = vld [vmem:[%s207] sm:$0x1]
        %v478 = vlaneseq
        %v479 = vshrl.u32 %v478, 7
        %v480 = vlaneseq
        %v481 = vshrl.u32 %v480, 7
        %v482 = vsub.s32 0, %v481
        %v483 = vrot.slane %v477, %v482
        %vm484 = vcmp.eq.s32.totalorder %v479, %v483
        %v485 = vsel %vm484, 1, 0
        %v486 = vcvt.s32.f32 %v485
        %vm497 = vcmask 1041409
        %v498 = vsel %vm497, %v372, %v371
        %vm499 = vcmask 1042434
        %v500 = vsel %vm499, %v373, %v498
        %vm501 = vcmask 1043459
        %v502 = vsel %vm501, %v374, %v500
        %vm503 = vcmask 1044484
        %v504 = vsel %vm503, %v375, %v502
        %vm505 = vcmask 1045509
        %v506 = vsel %vm505, %v376, %v504
        %vm507 = vcmask 1046534
        %v508 = vsel %vm507, %v377, %v506
        %vm509 = vcmask 1047559
        %v510 = vsel %vm509, %v378, %v508
        %v511 = vsel %vm497, %v380, %v379
        %vm513 = vcmask 80896
        %v515 = vsel %vm513, %v486, 0
        %vm517 = vcmask 1041408
        %v518 = vsel %vm517, %v511, 0
        %520 = vmatprep.subr.mxu0 0.0
        %521 = vmatpush1.msra.mxu0 0.0
        %522 = vmatprep.subr.mxu0 0.0
        %523 = vmatpush1.msra.mxu0 0.0
        %524 = vmatprep.subr.mxu0 0.0
        %525 = vmatpush1.msra.mxu0 0.0
        %526 = vmatprep.subr.mxu0 0.0
        %527 = vmatpush1.msra.mxu0 0.0
        %528 = vmatprep.subr.mxu0 0.0
        %529 = vmatpush1.msra.mxu0 0.0
        %530 = vmatprep.subr.mxu0 0.0
        %531 = vmatpush1.msra.mxu0 0.0
        %532 = vmatprep.subr.mxu0 0.0
        %533 = vmatpush1.msra.mxu0 0.0
        %534 = vmatprep.subr.mxu0 0.0
        %535 = vmatpush1.msra.mxu0 0.0
        %536 = vmatprep.subr.mxu0 0.0
        %537 = vmatpush1.msra.mxu0 0.0
        %538 = vmatprep.subr.mxu0 0.0
        %539 = vmatpush1.msra.mxu0 0.0
        %540 = vmatprep.subr.mxu0 0.0
        %541 = vmatpush1.msra.mxu0 0.0
        %542 = vmatprep.subr.mxu0 0.0
        %543 = vmatpush1.msra.mxu0 0.0
        %544 = vmatprep.subr.mxu0 0.0
        %545 = vmatpush1.msra.mxu0 0.0
        %546 = vmatprep.subr.mxu0 0.0
        %547 = vmatpush1.msra.mxu0 0.0
        %548 = vmatprep.subr.mxu0 0.0
        %549 = vmatpush1.msra.mxu0 %v518
        %550 = vmatprep.subr.mxu0 0.0
        %551 = vmatpush1.msra.mxu0 %v510
        %552 = vmatprep.subr.mxu0 0.0
        %553 = vmatpush2.msra.mxu0 0.0
        %554 = vmatprep.subr.mxu0 0.0
        %555 = vmatpush2.msra.mxu0 0.0
        %556 = vmatprep.subr.mxu0 0.0
        %557 = vmatpush2.msra.mxu0 0.0
        %558 = vmatprep.subr.mxu0 0.0
        %559 = vmatpush2.msra.mxu0 0.0
        %560 = vmatprep.subr.mxu0 0.0
        %561 = vmatpush2.msra.mxu0 0.0
        %562 = vmatprep.subr.mxu0 0.0
        %563 = vmatpush2.msra.mxu0 0.0
        %564 = vmatprep.subr.mxu0 0.0
        %565 = vmatpush2.msra.mxu0 0.0
        %566 = vmatprep.subr.mxu0 0.0
        %567 = vmatpush2.msra.mxu0 0.0
        %568 = vmatprep.subr.mxu0 0.0
        %569 = vmatpush2.msra.mxu0 0.0
        %570 = vmatprep.subr.mxu0 0.0
        %571 = vmatpush2.msra.mxu0 0.0
        %572 = vmatprep.subr.mxu0 0.0
        %573 = vmatpush2.msra.mxu0 0.0
        %574 = vmatprep.subr.mxu0 0.0
        %575 = vmatpush2.msra.mxu0 0.0
        %576 = vmatprep.subr.mxu0 0.0
        %577 = vmatpush2.msra.mxu0 0.0
        %578 = vmatprep.subr.mxu0 0.0
        %579 = vmatpush2.msra.mxu0 0.0
        %580 = vmatprep.subr.mxu0 0.0
        %581 = vmatpush2.msra.mxu0 0.0
        %582 = vmatprep.subr.mxu0 0.0
        %583 = vmatpush2.msra.mxu0 0.0
        %584 = vmatprep.mubr.f32.mxu0 0.0
        %585 = vmatmul.mubr.f32.gmra.mxu0 %v515
        %v586 = vpop.f32.mrf.mxu0
        %v587 = vadd.f32 0.0, %v586
        %v588 = vpop.f32.mrf.mxu0
        %589 = vdwg.mxu0
        %vm590 = vcmask 77824
        %v591 = vsel %vm590, %v486, 0.0
        %592 = vadd.xlane.f32.xlu0 %v591
        %v593 = vpop.xlane.xlu0 %592
        %v594 = vmax.f32 %v593, 1.0
        %v595 = vrcp.pop %v594
        %v596 = vmul.f32 %v587, %v595
        %v605 = vsel %vm497, %v470, %v469
        %v606 = vsel %vm499, %v471, %v605
        %v607 = vsel %vm501, %v472, %v606
        %v608 = vsel %vm503, %v473, %v607
        %v609 = vsel %vm505, %v474, %v608
        %v610 = vsel %vm507, %v475, %v609
        %v611 = vsel %vm509, %v476, %v610
        %v612 = vmul.f32 %v596, %v596
        %v614 = vrot.slane %v612, 3
        %vm616 = vcmask 1044480
        %v617 = vsel %vm616, %v596, %v614
        %v618 = vsel %vm280, %v611, 0
        %v621 = vsel %vm280, 1.0, 0
        %v624 = vsel %vm280, %v617, 0
        %v626 = vsel %vm280, %v614, 0
        %628 = vmatprep.subr.mxu0 0.0
        %629 = vmatpush1.xpose.msra.mxu0 0.0
        %630 = vmatprep.subr.mxu0 0.0
        %631 = vmatpush1.xpose.msra.mxu0 0.0
        %632 = vmatprep.subr.mxu0 0.0
        %633 = vmatpush1.xpose.msra.mxu0 0.0
        %634 = vmatprep.subr.mxu0 0.0
        %635 = vmatpush1.xpose.msra.mxu0 0.0
        %636 = vmatprep.subr.mxu0 0.0
        %637 = vmatpush1.xpose.msra.mxu0 0.0
        %638 = vmatprep.subr.mxu0 0.0
        %639 = vmatpush1.xpose.msra.mxu0 0.0
        %640 = vmatprep.subr.mxu0 0.0
        %641 = vmatpush1.xpose.msra.mxu0 0.0
        %642 = vmatprep.subr.mxu0 0.0
        %643 = vmatpush1.xpose.msra.mxu0 0.0
        %644 = vmatprep.subr.mxu0 0.0
        %645 = vmatpush1.xpose.msra.mxu0 0.0
        %646 = vmatprep.subr.mxu0 0.0
        %647 = vmatpush1.xpose.msra.mxu0 0.0
        %648 = vmatprep.subr.mxu0 0.0
        %649 = vmatpush1.xpose.msra.mxu0 0.0
        %650 = vmatprep.subr.mxu0 0.0
        %651 = vmatpush1.xpose.msra.mxu0 0.0
        %652 = vmatprep.subr.mxu0 0.0
        %653 = vmatpush1.xpose.msra.mxu0 0.0
        %654 = vmatprep.subr.mxu0 0.0
        %655 = vmatpush1.xpose.msra.mxu0 0.0
        %656 = vmatprep.subr.mxu0 0.0
        %657 = vmatpush1.xpose.msra.mxu0 %v626
        %658 = vmatprep.subr.mxu0 0.0
        %659 = vmatpush1.xpose.msra.mxu0 %v624
        %660 = vmatprep.subr.mxu0 0.0
        %661 = vmatpush2.xpose.msra.mxu0 0.0
        %662 = vmatprep.subr.mxu0 0.0
        %663 = vmatpush2.xpose.msra.mxu0 0.0
        %664 = vmatprep.subr.mxu0 0.0
        %665 = vmatpush2.xpose.msra.mxu0 0.0
        %666 = vmatprep.subr.mxu0 0.0
        %667 = vmatpush2.xpose.msra.mxu0 0.0
        %668 = vmatprep.subr.mxu0 0.0
        %669 = vmatpush2.xpose.msra.mxu0 0.0
        %670 = vmatprep.subr.mxu0 0.0
        %671 = vmatpush2.xpose.msra.mxu0 0.0
        %672 = vmatprep.subr.mxu0 0.0
        %673 = vmatpush2.xpose.msra.mxu0 0.0
        %674 = vmatprep.subr.mxu0 0.0
        %675 = vmatpush2.xpose.msra.mxu0 0.0
        %676 = vmatprep.subr.mxu0 0.0
        %677 = vmatpush2.xpose.msra.mxu0 0.0
        %678 = vmatprep.subr.mxu0 0.0
        %679 = vmatpush2.xpose.msra.mxu0 0.0
        %680 = vmatprep.subr.mxu0 0.0
        %681 = vmatpush2.xpose.msra.mxu0 0.0
        %682 = vmatprep.subr.mxu0 0.0
        %683 = vmatpush2.xpose.msra.mxu0 0.0
        %684 = vmatprep.subr.mxu0 0.0
        %685 = vmatpush2.xpose.msra.mxu0 0.0
        %686 = vmatprep.subr.mxu0 0.0
        %687 = vmatpush2.xpose.msra.mxu0 0.0
        %688 = vmatprep.subr.mxu0 0.0
        %689 = vmatpush2.xpose.msra.mxu0 0.0
        %690 = vmatprep.subr.mxu0 0.0
        %691 = vmatpush2.xpose.msra.mxu0 0.0
        %692 = vmatprep.mubr.f32.mxu0 0.0
        %693 = vmatmul.mubr.f32.gmra.mxu0 %v618
        %v694 = vpop.f32.mrf.mxu0
        %v695 = vadd.f32 0.0, %v694
        %v696 = vpop.f32.mrf.mxu0
        %697 = vmatprep.mubr.f32.mxu0 0.0
        %698 = vmatmul.mubr.f32.gmra.mxu0 %v621
        %v699 = vpop.f32.mrf.mxu0
        %v700 = vadd.f32 0.0, %v699
        %v701 = vpop.f32.mrf.mxu0
        %702 = vdwg.mxu0
        %v703 = vmul.f32 %v469, %v469
        %v704 = vmul.f32 %v470, %v470
        %v705 = vmul.f32 %v471, %v471
        %v706 = vmul.f32 %v472, %v472
        %v707 = vmul.f32 %v473, %v473
        %v708 = vmul.f32 %v474, %v474
        %v709 = vmul.f32 %v475, %v475
        %v710 = vmul.f32 %v476, %v476
        %v719 = vsel %vm497, %v704, %v703
        %v720 = vsel %vm499, %v705, %v719
        %v721 = vsel %vm501, %v706, %v720
        %v722 = vsel %vm503, %v707, %v721
        %v723 = vsel %vm505, %v708, %v722
        %v724 = vsel %vm507, %v709, %v723
        %v725 = vsel %vm509, %v710, %v724
        %v727 = vsel %vm280, %v725, 0.0
        %728 = vadd.xlane.f32.xlu0 %v727
        %v729 = vpop.xlane.xlu0 %728
        %v730 = vmul.f32 %v695, 2.0
        %v731 = vsub.f32 %v729, %v730
        %v732 = vlaneseq
        %v733 = vshrl.u32 %v732, 7
        %v734 = vsub.s32 0, %v733
        %v735 = vrot.slane %v700, %v734
        %737 = vrot.lane.b32.xlu0 %v735, 123
        %v738 = vpop.permute.xlu0 %737
        %v740 = vadd.f32 %v731, %v738
        %v741 = vsub.f32 0.0, %v740
        %v742 = vmul.f32 %v741, 0.03125
        %vm743 = vcmask 39936
        %744 = vst.msk [vmem:[%s259] sm:$0xff] %vm743, %v742
        %p745 = scmp.lt.s32.totalorder %s20, 3
        %s746 = scalar_select %p745, %s20, 3
        %s747 = smul.addr %s746, 8
        %s748 = scalar_lea.vmem %s3, %s747
        // Predicated region
        $region45: #{tpu_custom_call.1} parent=31 // pred_check
          %p749 = pneg %p116
        $region46: #{tpu_custom_call.1} parent=31 // pred_check_branch
          %751 = sbr.rel (%p749) target = $region48
        $region47: #{tpu_custom_call.1} parent=31 // pred_region
          _
        $region48: #{tpu_custom_call.1} parent=31 // pred_fallthru
          _
      $region32: #{tpu_custom_call.1} parent=5 // pred_fallthru
        _
      %p752 = scmp.le.s32.totalorder 2, %s15
      // Predicated region
      $region49: #{tpu_custom_call.1} parent=5 // pred_check
        %p753 = pneg %p752
      $region50: #{tpu_custom_call.1} parent=5 // pred_check_branch
        %755 = sbr.rel (%p753) target = $region52
      $region51: #{tpu_custom_call.1} parent=5 // pred_region
        %s756 = ssub.s32 %s15, 2
        // Predicated region
        $region53: #{tpu_custom_call.1} parent=51 // pred_check
          %p757 = pneg %p122
        $region54: #{tpu_custom_call.1} parent=51 // pred_check_branch
          %759 = sbr.rel (%p757) target = $region56
        $region55: #{tpu_custom_call.1} parent=51 // pred_region
          %p760 = scmp.lt.s32.totalorder %s21, 3
          %s761 = scalar_select %p760, %s21, 3
          %s762 = smul.addr %s761, 8
          %s763 = scalar_lea.vmem %s3, %s762
        $region56: #{tpu_custom_call.1} parent=51 // pred_fallthru
          _
      $region52: #{tpu_custom_call.1} parent=5 // pred_fallthru
        _
    $region6: #{tpu_custom_call.1} parent=1 // loop_footer
      %s19 = sadd.s32 1, %s15
    $region7: #{tpu_custom_call.1} parent=1 // loop_footer_branch
      %14 = sbr.rel target = $region3
    $region8: #{tpu_custom_call.1} parent=1 // loop_exit
      _
    %764 = vsyncpa [#allocation3], 1
    %s765 = scalar_lea.sflag [#allocation3], 1
    %766 = vsyncpa %s765, 1
    %767 = vsyncpa [#allocation5], 1
    %s768 = scalar_lea.sflag [#allocation5], 1
    %769 = vsyncpa %s768, 1

</llo_original>
